<compile_context>
chip_gen: v7x
topology: tpu7x:2x2x1
jax: 0.10.0
libtpu: 0.0.40
codegen_flags: <defaults>
</compile_context>

<pallas_src>
import jax
import jax.numpy as jnp
from jax.experimental import pallas as pl
from jax.experimental.pallas import tpu as pltpu

LANE = 128            # output lane width: out_dim padded to a multiple of this
_MAX_TB = 512         # largest batch tile (fills MXU M dim, amortizes grid overhead)
_VMEM_LIMIT = 32 * 1024 * 1024


def _round_up(n, m):
    return ((n + m - 1) // m) * m


def _batch_tiling(B):
    """Pick (TB, b_pad).

    Goals: big tiles (MXU M-dim fill + per-grid-step overhead amortization),
    >= 2 grid steps when there is enough work to shard across v7x's two
    TensorCores, and bounded batch-padding waste.
    """
    b8 = _round_up(max(B, 1), 8)
    if b8 < 512:
        return b8, b8                       # single tile, zero extra padding
    if b8 % 512 == 0:
        return (512 if b8 > 512 else 256), b8   # >=2 tiles of >=256 rows
    if b8 % 256 == 0:
        return 256, b8
    if b8 % 128 == 0:
        return 128, b8
    return 256, _round_up(b8, 256)          # ragged large batch: pad < 256 rows


# ---------------------------------------------------------------------------
# Kernels
# ---------------------------------------------------------------------------

def _liquid_step_kernel(x_ref, s_ref, w_ref, u_ref, b_ref, o_ref):
    # Two trans-B MXU contractions into one f32 accumulator; activations are
    # cast to bf16 on the VPU here (hides under MXU/DMA), weights arrive bf16.
    acc = jax.lax.dot_general(
        x_ref[...].astype(jnp.bfloat16), w_ref[...],
        dimension_numbers=(((1,), (1,)), ((), ())),
        preferred_element_type=jnp.float32,
    )
    acc = acc + jax.lax.dot_general(
        s_ref[...].astype(jnp.bfloat16), u_ref[...],
        dimension_numbers=(((1,), (1,)), ((), ())),
        preferred_element_type=jnp.float32,
    )
    o_ref[...] = jnp.tanh(acc + b_ref[...]).astype(o_ref.dtype)


def _liquid_step_kernel_nostate(x_ref, w_ref, b_ref, o_ref):
    # prev_state=None static branch: no U contraction, no zeros matmul/DMA.
    acc = jax.lax.dot_general(
        x_ref[...].astype(jnp.bfloat16), w_ref[...],
        dimension_numbers=(((1,), (1,)), ((), ())),
        preferred_element_type=jnp.float32,
    )
    o_ref[...] = jnp.tanh(acc + b_ref[...]).astype(o_ref.dtype)


def _liquid_scan_kernel(x_ref, w_ref, u_ref, b_ref, o_ref, state_sc):
    # grid = (batch_tiles, T); time is the innermost ("arbitrary") axis.
    # The recurrent state lives in an f32 VMEM scratch for the whole sequence
    # (bf16 only at the MXU input), weights stay resident across all steps.
    @pl.when(pl.program_id(1) == 0)
    def _():
        state_sc[...] = jnp.zeros_like(state_sc)

    acc = jax.lax.dot_general(
        x_ref[...].astype(jnp.bfloat16), w_ref[...],
        dimension_numbers=(((1,), (1,)), ((), ())),
        preferred_element_type=jnp.float32,
    )
    acc = acc + jax.lax.dot_general(
        state_sc[...].astype(jnp.bfloat16), u_ref[...],
        dimension_numbers=(((1,), (1,)), ((), ())),
        preferred_element_type=jnp.float32,
    )
    new_state = jnp.tanh(acc + b_ref[...])        # f32
    state_sc[...] = new_state                     # carried to next time step
    o_ref[...] = new_state.astype(o_ref.dtype)    # per-step output (bf16)


# ---------------------------------------------------------------------------
# Parameter prep (one time)
# ---------------------------------------------------------------------------

def prepare_liquid_params(W, U, bias):
    """Pad the output dim to a lane multiple and cast weights to bf16 once."""
    out_dim, in_dim = W.shape
    n_pad = _round_up(out_dim, LANE)
    w = jnp.pad(W, ((0, n_pad - out_dim), (0, 0))).astype(jnp.bfloat16)        # [n_pad, in_dim]
    u = jnp.pad(U, ((0, n_pad - out_dim), (0, 0))).astype(jnp.bfloat16)        # [n_pad, out_dim]
    u_sq = jnp.pad(U, ((0, n_pad - out_dim),
                       (0, n_pad - out_dim))).astype(jnp.bfloat16)             # [n_pad, n_pad]
    b = jnp.pad(bias, (0, n_pad - out_dim)).reshape(1, n_pad).astype(jnp.float32)
    return dict(w=w, u=u, u_sq=u_sq, bias=b,
                in_dim=in_dim, out_dim=out_dim, n_pad=n_pad)


# ---------------------------------------------------------------------------
# Single-step forward (matches LiquidLayer.forward)
# ---------------------------------------------------------------------------

def liquid_layer(x, prev_state, params, *, out_dtype=jnp.bfloat16, trim=True):
    """x: [B, in_dim], prev_state: [B, out_dim] or None -> [B, out_dim].

    Set trim=False (and keep n_pad columns) when driving a recurrent loop from
    the wrapper so the padded layout survives until one final slice.
    """
    w, u, b = params["w"], params["u"], params["bias"]
    in_dim, out_dim, n_pad = params["in_dim"], params["out_dim"], params["n_pad"]

    B = x.shape[0]
    tb, b_pad = _batch_tiling(B)
    if b_pad != B:
        x = jnp.pad(x, ((0, b_pad - B), (0, 0)))
        if prev_state is not None:
            prev_state = jnp.pad(prev_state, ((0, b_pad - B), (0, 0)))

    grid = (b_pad // tb,)
    cparams = pltpu.CompilerParams(
        dimension_semantics=("parallel",),          # shard batch tiles across v7x TCs
        vmem_limit_bytes=_VMEM_LIMIT,
    )
    out_shape = jax.ShapeDtypeStruct((b_pad, n_pad), out_dtype)
    out_spec = pl.BlockSpec((tb, n_pad), lambda i: (i, 0))

    if prev_state is None:
        out = pl.pallas_call(
            _liquid_step_kernel_nostate,
            out_shape=out_shape,
            grid=grid,
            in_specs=[
                pl.BlockSpec((tb, in_dim), lambda i: (i, 0)),     # x, streamed over batch
                pl.BlockSpec((n_pad, in_dim), lambda i: (0, 0)),  # W, resident
                pl.BlockSpec((1, n_pad), lambda i: (0, 0)),       # bias, resident
            ],
            out_specs=out_spec,
            compiler_params=cparams,
        )(x, w, b)
    else:
        out = pl.pallas_call(
            _liquid_step_kernel,
            out_shape=out_shape,
            grid=grid,
            in_specs=[
                pl.BlockSpec((tb, in_dim), lambda i: (i, 0)),     # x
                pl.BlockSpec((tb, out_dim), lambda i: (i, 0)),    # prev_state
                pl.BlockSpec((n_pad, in_dim), lambda i: (0, 0)),  # W, resident
                pl.BlockSpec((n_pad, out_dim), lambda i: (0, 0)), # U, resident
                pl.BlockSpec((1, n_pad), lambda i: (0, 0)),       # bias, resident
            ],
            out_specs=out_spec,
            compiler_params=cparams,
        )(x, prev_state, w, u, b)

    if trim:
        return out[:B, :out_dim]
    return out


# ---------------------------------------------------------------------------
# Recurrent driver: T steps fused in one pallas_call (state in VMEM)
# ---------------------------------------------------------------------------

def liquid_layer_scan(xs, params, *, out_dtype=jnp.bfloat16, trim=True):
    """xs: [T, B, in_dim] -> per-step states [T, B, out_dim].

    Initial state is zeros (i.e. the module called with prev_state=None on the
    first step and chained thereafter).
    """
    w, u_sq, b = params["w"], params["u_sq"], params["bias"]
    in_dim, out_dim, n_pad = params["in_dim"], params["out_dim"], params["n_pad"]

    T, B, _ = xs.shape
    tb, b_pad = _batch_tiling(B)
    if b_pad != B:
        xs = jnp.pad(xs, ((0, 0), (0, b_pad - B), (0, 0)))

    out = pl.pallas_call(
        _liquid_scan_kernel,
        out_shape=jax.ShapeDtypeStruct((T, b_pad, n_pad), out_dtype),
        grid=(b_pad // tb, T),
        in_specs=[
            pl.BlockSpec((None, tb, in_dim), lambda i, t: (t, i, 0)),  # x_t, streamed
            pl.BlockSpec((n_pad, in_dim), lambda i, t: (0, 0)),        # W, resident
            pl.BlockSpec((n_pad, n_pad), lambda i, t: (0, 0)),         # U, resident
            pl.BlockSpec((1, n_pad), lambda i, t: (0, 0)),             # bias, resident
        ],
        out_specs=pl.BlockSpec((None, tb, n_pad), lambda i, t: (t, i, 0)),
        scratch_shapes=[pltpu.VMEM((tb, n_pad), jnp.float32)],         # recurrent state
        compiler_params=pltpu.CompilerParams(
            dimension_semantics=("parallel", "arbitrary"),  # batch across TCs, time serial
            vmem_limit_bytes=_VMEM_LIMIT,
        ),
    )(xs, w, u_sq, b)

    if trim:
        return out[:, :B, :out_dim]
    return out


# ---------------------------------------------------------------------------
# Self test
# ---------------------------------------------------------------------------

if __name__ == "__main__":
    key = jax.random.PRNGKey(0)
    k_x, k_h, k_w, k_u, k_seq = jax.random.split(key, 5)

    B, input_dim, output_dim, T = 2, 16, 32, 8

    x = jax.random.normal(k_x, (B, input_dim), dtype=jnp.float32)
    prev_state = jax.random.normal(k_h, (B, output_dim), dtype=jnp.float32)

    # Deterministic parameter init matching __init__: randn * 0.02, zero bias.
    W = jax.random.normal(k_w, (output_dim, input_dim), dtype=jnp.float32) * 0.02
    U = jax.random.normal(k_u, (output_dim, output_dim), dtype=jnp.float32) * 0.02
    bias = jnp.zeros((output_dim,), dtype=jnp.float32)

    params = prepare_liquid_params(W, U, bias)

    # --- single step, with state ---
    out = jax.block_until_ready(liquid_layer(x, prev_state, params))
    ref = jnp.tanh(x @ W.T + prev_state @ U.T + bias)
    assert out.shape == (B, output_dim)
    err = float(jnp.max(jnp.abs(out.astype(jnp.float32) - ref)))
    assert jnp.allclose(out.astype(jnp.float32), ref, atol=2e-2, rtol=2e-2), err

    # --- single step, prev_state=None (no U-path work) ---
    out0 = jax.block_until_ready(liquid_layer(x, None, params))
    ref0 = jnp.tanh(x @ W.T + bias)
    assert out0.shape == (B, output_dim)
    err0 = float(jnp.max(jnp.abs(out0.astype(jnp.float32) - ref0)))
    assert jnp.allclose(out0.astype(jnp.float32), ref0, atol=2e-2, rtol=2e-2), err0

    # --- fused recurrent driver over T steps (state resident in VMEM) ---
    xs = jax.random.normal(k_seq, (T, B, input_dim), dtype=jnp.float32)
    seq = jax.block_until_ready(liquid_layer_scan(xs, params))
    s = jnp.zeros((B, output_dim), dtype=jnp.float32)
    refs = []
    for t in range(T):
        s = jnp.tanh(xs[t] @ W.T + s @ U.T + bias)
        refs.append(s)
    ref_seq = jnp.stack(refs)
    assert seq.shape == (T, B, output_dim)
    err_s = float(jnp.max(jnp.abs(seq.astype(jnp.float32) - ref_seq)))
    assert jnp.allclose(seq.astype(jnp.float32), ref_seq, atol=2e-2, rtol=2e-2), err_s

    print("KERNEL_OK")
</pallas_src>

<mosaic_0001>
module attributes {stable_mosaic.version = 11 : i64} {
  func.func @_liquid_step_kernel(%arg0: i32, %arg1: memref<8x16xf32, #tpu.memory_space<vmem>>, %arg2: memref<8x32xf32, #tpu.memory_space<vmem>>, %arg3: memref<128x16xbf16, #tpu.memory_space<vmem>>, %arg4: memref<128x32xbf16, #tpu.memory_space<vmem>>, %arg5: memref<1x128xf32, #tpu.memory_space<vmem>>, %arg6: memref<8x128xbf16, #tpu.memory_space<vmem>>) attributes {dimension_semantics = [#tpu.dimension_semantics<parallel>], iteration_bounds = array<i64: 1>, scalar_prefetch = 0 : i64, scratch_operands = 0 : i64, tpu.core_type = #tpu.core_type<tc>, window_params = [{transform_indices = @transform_0, window_bounds = array<i64: 8, 16>}, {transform_indices = @transform_1, window_bounds = array<i64: 8, 32>}, {pipeline_mode = #tpu.pipeline_mode<synchronous>, transform_indices = @transform_2, window_bounds = array<i64: 128, 16>}, {pipeline_mode = #tpu.pipeline_mode<synchronous>, transform_indices = @transform_3, window_bounds = array<i64: 128, 32>}, {pipeline_mode = #tpu.pipeline_mode<synchronous>, transform_indices = @transform_4, window_bounds = array<i64: 1, 128>}, {transform_indices = @transform_5, window_bounds = array<i64: 8, 128>}]} {
    %c0 = arith.constant 0 : index
    %c0_0 = arith.constant 0 : index
    %0 = vector.load %arg1[%c0, %c0_0] : memref<8x16xf32, #tpu.memory_space<vmem>>, vector<8x16xf32>
    %1 = arith.truncf %0 : vector<8x16xf32> to vector<8x16xbf16>
    %c0_1 = arith.constant 0 : index
    %c0_2 = arith.constant 0 : index
    %2 = vector.load %arg3[%c0_1, %c0_2] : memref<128x16xbf16, #tpu.memory_space<vmem>>, vector<128x16xbf16>
    %cst = arith.constant dense<0.000000e+00> : vector<8x128xf32>
    %3 = tpu.matmul %1, %2, %cst {dimension_numbers = #tpu.dot_dimension_numbers<[1], [1], [0], [0], [0, 0, 1, 0], [], []>} : vector<8x16xbf16>, vector<128x16xbf16>, vector<8x128xf32> -> vector<8x128xf32>
    %c0_3 = arith.constant 0 : index
    %c0_4 = arith.constant 0 : index
    %4 = vector.load %arg2[%c0_3, %c0_4] : memref<8x32xf32, #tpu.memory_space<vmem>>, vector<8x32xf32>
    %5 = arith.truncf %4 : vector<8x32xf32> to vector<8x32xbf16>
    %c0_5 = arith.constant 0 : index
    %c0_6 = arith.constant 0 : index
    %6 = vector.load %arg4[%c0_5, %c0_6] : memref<128x32xbf16, #tpu.memory_space<vmem>>, vector<128x32xbf16>
    %cst_7 = arith.constant dense<0.000000e+00> : vector<8x128xf32>
    %7 = tpu.matmul %5, %6, %cst_7 {dimension_numbers = #tpu.dot_dimension_numbers<[1], [1], [0], [0], [0, 0, 1, 0], [], []>} : vector<8x32xbf16>, vector<128x32xbf16>, vector<8x128xf32> -> vector<8x128xf32>
    %8 = arith.addf %3, %7 : vector<8x128xf32>
    %c0_8 = arith.constant 0 : index
    %c0_9 = arith.constant 0 : index
    %9 = vector.load %arg5[%c0_8, %c0_9] : memref<1x128xf32, #tpu.memory_space<vmem>>, vector<1x128xf32>
    %10 = vector.broadcast %9 : vector<1x128xf32> to vector<8x128xf32>
    %11 = arith.addf %8, %10 : vector<8x128xf32>
    %12 = math.tanh %11 : vector<8x128xf32>
    %13 = arith.truncf %12 : vector<8x128xf32> to vector<8x128xbf16>
    %c0_10 = arith.constant 0 : index
    %c0_11 = arith.constant 0 : index
    %14 = vector.load %arg6[%c0_10, %c0_11] : memref<8x128xbf16, #tpu.memory_space<vmem>>, vector<8x128xbf16>
    tpu.vector_store %arg6[%c0_10, %c0_11], %13 {strides = array<i32>} : memref<8x128xbf16, #tpu.memory_space<vmem>>, vector<8x128xbf16>,
    return
  }
  func.func @transform_0(%arg0: i32) -> (i32, i32) {
    %c0_i32 = arith.constant 0 : i32
    %c0_i32_0 = arith.constant 0 : i32
    return %arg0, %c0_i32 : i32, i32
  }
  func.func @transform_1(%arg0: i32) -> (i32, i32) {
    %c0_i32 = arith.constant 0 : i32
    %c0_i32_0 = arith.constant 0 : i32
    return %arg0, %c0_i32 : i32, i32
  }
  func.func @transform_2(%arg0: i32) -> (i32, i32) {
    %c0_i32 = arith.constant 0 : i32
    %c0_i32_0 = arith.constant 0 : i32
    %c0_i32_1 = arith.constant 0 : i32
    return %c0_i32, %c0_i32_0 : i32, i32
  }
  func.func @transform_3(%arg0: i32) -> (i32, i32) {
    %c0_i32 = arith.constant 0 : i32
    %c0_i32_0 = arith.constant 0 : i32
    %c0_i32_1 = arith.constant 0 : i32
    return %c0_i32, %c0_i32_0 : i32, i32
  }
  func.func @transform_4(%arg0: i32) -> (i32, i32) {
    %c0_i32 = arith.constant 0 : i32
    %c0_i32_0 = arith.constant 0 : i32
    %c0_i32_1 = arith.constant 0 : i32
    return %c0_i32, %c0_i32_0 : i32, i32
  }
  func.func @transform_5(%arg0: i32) -> (i32, i32) {
    %c0_i32 = arith.constant 0 : i32
    %c0_i32_0 = arith.constant 0 : i32
    return %arg0, %c0_i32 : i32, i32
  }
}

</mosaic_0001>

<llo_original>
// kernel: tpu_custom_call.1
$region0: #{tpu_custom_call.1}
  #allocation0 [shape = 'u32[]', space=smem, size = 0x4, offset = 0x4, fixed_abs, tag = 'smem constant byte address 0x4 - core index']
  #allocation1 [shape = 'u32[144,128]{1,0:T(1,128)}', space=vmem, size = 0x12000, scoped, tag = 'internal scratch']
  %s0 = inlined_call_operand.vmem [shape: f32[8,16], index: 0, kind: input, shape index: {}]
  %s1 = inlined_call_operand.vmem [shape: f32[8,32], index: 1, kind: input, shape index: {}]
  %s2 = inlined_call_operand.vmem [shape: bf16[128,16], index: 2, kind: input, shape index: {}]
  %s3 = inlined_call_operand.vmem [shape: bf16[128,32], index: 3, kind: input, shape index: {}]
  %s4 = inlined_call_operand.vmem [shape: f32[1,128], index: 4, kind: input, shape index: {}]
  %s5 = inlined_call_operand.hbm [shape: bf16[8,128], index: 5, kind: output, shape index: {}]
  %s6 = sld [smem:[#allocation0]]
  $region30: #{tpu_custom_call.1} parent=0
    _
  %s8 = ssub.s32 1, %s6
  %s9 = scalar_select 0, %s8, %s6
  $region1: #{tpu_custom_call.1} parent=0
    #allocation2 [shape = 'u8[2048]{0}', space=vmem, size = 0x800, scoped, tag = 'output window, operand 0, single buffered']
    #allocation3 [shape = 's32[1]{0}', space=sflag, size = 0x4, scoped, tag = 'scoped memory for tpu_custom_call.1']
    %10 = vsyncpa [#allocation3], 0
    // Predicated region
    $region2: #{tpu_custom_call.1} parent=1 // pred_check
      _
    $region3: #{tpu_custom_call.1} parent=1 // pred_check_branch
      %12 = sbr.rel (0) target = $region5
    $region4: #{tpu_custom_call.1} parent=1 // pred_region
      _
    $region5: #{tpu_custom_call.1} parent=1 // pred_fallthru
      _
    // Predicated region
    $region6: #{tpu_custom_call.1} parent=1 // pred_check
      _
    $region7: #{tpu_custom_call.1} parent=1 // pred_check_branch
      %14 = sbr.rel (0) target = $region9
    $region8: #{tpu_custom_call.1} parent=1 // pred_region
      _
    $region9: #{tpu_custom_call.1} parent=1 // pred_fallthru
      _
    // Predicated region
    $region10: #{tpu_custom_call.1} parent=1 // pred_check
      _
    $region11: #{tpu_custom_call.1} parent=1 // pred_check_branch
      %16 = sbr.rel (0) target = $region13
    $region12: #{tpu_custom_call.1} parent=1 // pred_region
      _
    $region13: #{tpu_custom_call.1} parent=1 // pred_fallthru
      _
    // Predicated region
    $region14: #{tpu_custom_call.1} parent=1 // pred_check
      _
    $region15: #{tpu_custom_call.1} parent=1 // pred_check_branch
      %18 = sbr.rel (0) target = $region17
    $region16: #{tpu_custom_call.1} parent=1 // pred_region
      _
    $region17: #{tpu_custom_call.1} parent=1 // pred_fallthru
      _
    // Predicated region
    $region18: #{tpu_custom_call.1} parent=1 // pred_check
      _
    $region19: #{tpu_custom_call.1} parent=1 // pred_check_branch
      %20 = sbr.rel (0) target = $region21
    $region20: #{tpu_custom_call.1} parent=1 // pred_region
      _
    $region21: #{tpu_custom_call.1} parent=1 // pred_fallthru
      _
    %v22 = vld [vmem:[%s0] sm:$0xff]
    %v23 = vpack.c.bf16 %v22, %v22
    %v24 = vld [vmem:[%s2] sm:$0xf]
    %v25 = vld [vmem:[%s2 + $0x4] sm:$0xf]
    %v26 = vld [vmem:[%s2 + $0x8] sm:$0xf]
    %v27 = vld [vmem:[%s2 + $0xc] sm:$0xf]
    %v28 = vld [vmem:[%s2 + $0x10] sm:$0xf]
    %v29 = vld [vmem:[%s2 + $0x14] sm:$0xf]
    %v30 = vld [vmem:[%s2 + $0x18] sm:$0xf]
    %v31 = vld [vmem:[%s2 + $0x1c] sm:$0xf]
    %v32 = vld [vmem:[%s2 + $0x20] sm:$0xf]
    %v33 = vld [vmem:[%s2 + $0x24] sm:$0xf]
    %v34 = vld [vmem:[%s2 + $0x28] sm:$0xf]
    %v35 = vld [vmem:[%s2 + $0x2c] sm:$0xf]
    %v36 = vld [vmem:[%s2 + $0x30] sm:$0xf]
    %v37 = vld [vmem:[%s2 + $0x34] sm:$0xf]
    %v38 = vld [vmem:[%s2 + $0x38] sm:$0xf]
    %v39 = vld [vmem:[%s2 + $0x3c] sm:$0xf]
    %v40 = vld [vmem:[%s1] sm:$0xff]
    %v41 = vpack.c.bf16 %v40, %v40
    %v42 = vld [vmem:[%s3] sm:$0xf]
    %v43 = vld [vmem:[%s3 + $0x4] sm:$0xf]
    %v44 = vld [vmem:[%s3 + $0x8] sm:$0xf]
    %v45 = vld [vmem:[%s3 + $0xc] sm:$0xf]
    %v46 = vld [vmem:[%s3 + $0x10] sm:$0xf]
    %v47 = vld [vmem:[%s3 + $0x14] sm:$0xf]
    %v48 = vld [vmem:[%s3 + $0x18] sm:$0xf]
    %v49 = vld [vmem:[%s3 + $0x1c] sm:$0xf]
    %v50 = vld [vmem:[%s3 + $0x20] sm:$0xf]
    %v51 = vld [vmem:[%s3 + $0x24] sm:$0xf]
    %v52 = vld [vmem:[%s3 + $0x28] sm:$0xf]
    %v53 = vld [vmem:[%s3 + $0x2c] sm:$0xf]
    %v54 = vld [vmem:[%s3 + $0x30] sm:$0xf]
    %v55 = vld [vmem:[%s3 + $0x34] sm:$0xf]
    %v56 = vld [vmem:[%s3 + $0x38] sm:$0xf]
    %v57 = vld [vmem:[%s3 + $0x3c] sm:$0xf]
    %v74 = vunpack.c.l.b16 %v42
    %v75 = vunpack.c.l.b16 %v43
    %v76 = vunpack.c.l.b16 %v44
    %v77 = vunpack.c.l.b16 %v45
    %v78 = vunpack.c.l.b16 %v46
    %v79 = vunpack.c.l.b16 %v47
    %v80 = vunpack.c.l.b16 %v48
    %v81 = vunpack.c.l.b16 %v49
    %v82 = vunpack.c.l.b16 %v50
    %v83 = vunpack.c.l.b16 %v51
    %v84 = vunpack.c.l.b16 %v52
    %v85 = vunpack.c.l.b16 %v53
    %v86 = vunpack.c.l.b16 %v54
    %v87 = vunpack.c.l.b16 %v55
    %v88 = vunpack.c.l.b16 %v56
    %v89 = vunpack.c.l.b16 %v57
    %v90 = vpack.c.b16 %v75, %v74
    %v91 = vpack.c.b16 %v77, %v76
    %v92 = vpack.c.b16 %v79, %v78
    %v93 = vpack.c.b16 %v81, %v80
    %v94 = vpack.c.b16 %v83, %v82
    %v95 = vpack.c.b16 %v85, %v84
    %v96 = vpack.c.b16 %v87, %v86
    %v97 = vpack.c.b16 %v89, %v88
    %vm98 = vcmask 261120
    %v100 = vsel %vm98, %v41, 0
    %v103 = vsel %vm98, %v90, 0
    %v106 = vsel %vm98, %v91, 0
    %v109 = vsel %vm98, %v92, 0
    %v112 = vsel %vm98, %v93, 0
    %v115 = vsel %vm98, %v94, 0
    %v118 = vsel %vm98, %v95, 0
    %v121 = vsel %vm98, %v96, 0
    %v124 = vsel %vm98, %v97, 0
    %126 = vmatprep.subr.bf16.mxu0 0
    %127 = vmatpush1.bf16.xpose.msra.mxu0 %v103
    %128 = vmatprep.subr.bf16.mxu0 0
    %129 = vmatpush1.bf16.xpose.msra.mxu0 %v106
    %130 = vmatprep.subr.bf16.mxu0 0
    %131 = vmatpush1.bf16.xpose.msra.mxu0 %v109
    %132 = vmatprep.subr.bf16.mxu0 0
    %133 = vmatpush1.bf16.xpose.msra.mxu0 %v112
    %134 = vmatprep.subr.bf16.mxu0 0
    %135 = vmatpush1.bf16.xpose.msra.mxu0 %v115
    %136 = vmatprep.subr.bf16.mxu0 0
    %137 = vmatpush1.bf16.xpose.msra.mxu0 %v118
    %138 = vmatprep.subr.bf16.mxu0 0
    %139 = vmatpush1.bf16.xpose.msra.mxu0 %v121
    %140 = vmatprep.subr.bf16.mxu0 0
    %141 = vmatpush1.bf16.xpose.msra.mxu0 %v124
    %142 = vmatprep.subr.bf16.mxu0 0
    %143 = vmatpush1.bf16.xpose.msra.mxu0 0
    %144 = vmatprep.subr.bf16.mxu0 0
    %145 = vmatpush1.bf16.xpose.msra.mxu0 0
    %146 = vmatprep.subr.bf16.mxu0 0
    %147 = vmatpush1.bf16.xpose.msra.mxu0 0
    %148 = vmatprep.subr.bf16.mxu0 0
    %149 = vmatpush1.bf16.xpose.msra.mxu0 0
    %150 = vmatprep.subr.bf16.mxu0 0
    %151 = vmatpush1.bf16.xpose.msra.mxu0 0
    %152 = vmatprep.subr.bf16.mxu0 0
    %153 = vmatpush1.bf16.xpose.msra.mxu0 0
    %154 = vmatprep.subr.bf16.mxu0 0
    %155 = vmatpush1.bf16.xpose.msra.mxu0 0
    %156 = vmatprep.subr.bf16.mxu0 0
    %157 = vmatpush1.bf16.xpose.msra.mxu0 0
    %158 = vmatprep.mubr.bf16.mxu0 0
    %159 = vmatmul.mubr.bf16.gmra.mrb[0].mxu0 %v100
    %v160 = vpop.f32.mrb[0].mxu0
    %v161 = vadd.f32 0.0, %v160
    %v162 = vpop.f32.mrb[0].mxu0
    %v163 = vpop.f32.mrb[0].mxu0
    %v164 = vpop.f32.mrb[0].mxu0
    %165 = vdwg.mxu0
    %v182 = vunpack.c.l.b16 %v24
    %v183 = vunpack.c.l.b16 %v25
    %v184 = vunpack.c.l.b16 %v26
    %v185 = vunpack.c.l.b16 %v27
    %v186 = vunpack.c.l.b16 %v28
    %v187 = vunpack.c.l.b16 %v29
    %v188 = vunpack.c.l.b16 %v30
    %v189 = vunpack.c.l.b16 %v31
    %v190 = vunpack.c.l.b16 %v32
    %v191 = vunpack.c.l.b16 %v33
    %v192 = vunpack.c.l.b16 %v34
    %v193 = vunpack.c.l.b16 %v35
    %v194 = vunpack.c.l.b16 %v36
    %v195 = vunpack.c.l.b16 %v37
    %v196 = vunpack.c.l.b16 %v38
    %v197 = vunpack.c.l.b16 %v39
    %v198 = vpack.c.b16 %v183, %v182
    %v199 = vpack.c.b16 %v185, %v184
    %v200 = vpack.c.b16 %v187, %v186
    %v201 = vpack.c.b16 %v189, %v188
    %v202 = vpack.c.b16 %v191, %v190
    %v203 = vpack.c.b16 %v193, %v192
    %v204 = vpack.c.b16 %v195, %v194
    %v205 = vpack.c.b16 %v197, %v196
    %vm206 = vcmask 130048
    %v208 = vsel %vm206, %v23, 0
    %v211 = vsel %vm206, %v198, 0
    %v214 = vsel %vm206, %v199, 0
    %v217 = vsel %vm206, %v200, 0
    %v220 = vsel %vm206, %v201, 0
    %v223 = vsel %vm206, %v202, 0
    %v226 = vsel %vm206, %v203, 0
    %v229 = vsel %vm206, %v204, 0
    %v232 = vsel %vm206, %v205, 0
    %234 = vmatprep.subr.bf16.mxu0 0
    %235 = vmatpush1.bf16.xpose.msra.mxu0 %v211
    %236 = vmatprep.subr.bf16.mxu0 0
    %237 = vmatpush1.bf16.xpose.msra.mxu0 %v214
    %238 = vmatprep.subr.bf16.mxu0 0
    %239 = vmatpush1.bf16.xpose.msra.mxu0 %v217
    %240 = vmatprep.subr.bf16.mxu0 0
    %241 = vmatpush1.bf16.xpose.msra.mxu0 %v220
    %242 = vmatprep.subr.bf16.mxu0 0
    %243 = vmatpush1.bf16.xpose.msra.mxu0 %v223
    %244 = vmatprep.subr.bf16.mxu0 0
    %245 = vmatpush1.bf16.xpose.msra.mxu0 %v226
    %246 = vmatprep.subr.bf16.mxu0 0
    %247 = vmatpush1.bf16.xpose.msra.mxu0 %v229
    %248 = vmatprep.subr.bf16.mxu0 0
    %249 = vmatpush1.bf16.xpose.msra.mxu0 %v232
    %250 = vmatprep.subr.bf16.mxu0 0
    %251 = vmatpush1.bf16.xpose.msra.mxu0 0
    %252 = vmatprep.subr.bf16.mxu0 0
    %253 = vmatpush1.bf16.xpose.msra.mxu0 0
    %254 = vmatprep.subr.bf16.mxu0 0
    %255 = vmatpush1.bf16.xpose.msra.mxu0 0
    %256 = vmatprep.subr.bf16.mxu0 0
    %257 = vmatpush1.bf16.xpose.msra.mxu0 0
    %258 = vmatprep.subr.bf16.mxu0 0
    %259 = vmatpush1.bf16.xpose.msra.mxu0 0
    %260 = vmatprep.subr.bf16.mxu0 0
    %261 = vmatpush1.bf16.xpose.msra.mxu0 0
    %262 = vmatprep.subr.bf16.mxu0 0
    %263 = vmatpush1.bf16.xpose.msra.mxu0 0
    %264 = vmatprep.subr.bf16.mxu0 0
    %265 = vmatpush1.bf16.xpose.msra.mxu0 0
    %266 = vmatprep.mubr.bf16.mxu0 0
    %267 = vmatmul.mubr.bf16.gmra.mrb[0].mxu0 %v208
    %v268 = vpop.f32.mrb[0].mxu0
    %v269 = vadd.f32 %v161, %v268
    %v270 = vpop.f32.mrb[0].mxu0
    %v271 = vpop.f32.mrb[0].mxu0
    %v272 = vpop.f32.mrb[0].mxu0
    %273 = vdwg.mxu0
    %v274 = vld [vmem:[%s4] sm:$0x1]
    %v276 = vlaneseq
    %v277 = vshrl.u32 %v276, 7
    %v278 = vsub.s32 0, %v277
    %v279 = vrot.slane %v274, %v278
    %v281 = vadd.f32 %v269, %v279
    %v282 = vtanh.pop %v281
    %v283 = vpack.c.bf16 %v282, %v282
    %284 = vst [vmem:[#allocation2] sm:$0xf] %v283
    // Predicated region
    $region22: #{tpu_custom_call.1} parent=1 // pred_check
      _
    $region23: #{tpu_custom_call.1} parent=1 // pred_check_branch
      %286 = sbr.rel (0) target = $region25
    $region24: #{tpu_custom_call.1} parent=1 // pred_region
      %s288 = ssub.s32 64, 64
      %289 = vsyncadd [#allocation3], %s288
      %s291 = sshll.u32 [#allocation2], 4
      %s292 = int_to_ptr.vmem [resolvable:$true] %s291
      %294 = dma.vmem_to_hbm [thread:$0]  %s292, 64, %s5, [#allocation3]
    $region25: #{tpu_custom_call.1} parent=1 // pred_fallthru
      _
    // Predicated region
    $region26: #{tpu_custom_call.1} parent=1 // pred_check
      _
    $region27: #{tpu_custom_call.1} parent=1 // pred_check_branch
      %296 = sbr.rel (0) target = $region29
    $region28: #{tpu_custom_call.1} parent=1 // pred_region
      %297 = dma.done [#allocation3], 64
    $region29: #{tpu_custom_call.1} parent=1 // pred_fallthru
      _
    %298 = vsyncpa [#allocation3], 1

</llo_original>
